<compile_context>
chip_gen: v7x
topology: tpu7x:2x2x1
jax: 0.10.0
libtpu: 0.0.40
codegen_flags: <defaults>
</compile_context>

<pallas_src>
import math

import numpy as np
import jax
import jax.numpy as jnp
from jax.experimental import pallas as pl
from jax.experimental.pallas import tpu as pltpu


# ---------------------------------------------------------------------------
# Parameter construction (numpy transcription of IntLUT / IntSoftmax.__init__)
# ---------------------------------------------------------------------------
def _build_intlut(fn, r, addrwidth, bits):
    alpha, beta = float(r[0]), float(r[1])
    entries = 2 ** addrwidth
    table_min, table_max = 0, 2 ** bits - 1
    denom = (beta - alpha) / (entries - 1)
    log2denom = int(math.ceil(math.log2(denom)))
    denom = 2.0 ** log2denom
    beta = alpha + denom * (entries - 1)
    idx = np.arange(entries, dtype=np.float32)
    x = idx * np.float32(denom) + np.float32(alpha)
    table = fn(x).astype(np.float32)
    o_out = bits - int(math.ceil(math.log2(float(table.max()))))
    table_q = np.clip(np.round(table * float(2 ** o_out)), table_min, table_max)
    return dict(alpha=alpha, beta=beta, denom=denom, log2denom=log2denom,
                entries=entries, O_out=o_out, table=table_q.astype(np.int64))


def build_int_softmax_config(head_dim, O_in):
    scale = 1.0 / math.sqrt(head_dim)

    # ---- exp LUT: exp(-x*scale) over [0, 200], 8-bit address / 8-bit values.
    exp_bits = 8
    exp_lut = _build_intlut(lambda x: np.exp(-x * np.float32(scale)),
                            (0.0, 200.0), addrwidth=8, bits=exp_bits)
    exp_log2denom = exp_lut["log2denom"] + O_in
    assert exp_log2denom >= 0, "exp_log2denom must be non-negative"
    exp_table = exp_lut["table"].copy()
    exp_table[-1] = 0                               # mirrors `self.exp_table[-1] = 0`

    # ---- Segmented reciprocal LUTs: 2^O_recip / x over 4 power-of-two ranges.
    o_recip = exp_lut["O_out"]
    base_rs = ((2 ** 0, 2 ** 3), (2 ** 3, 2 ** 6), (2 ** 6, 2 ** 9), (2 ** 9, 2 ** 12))
    recip_rs = tuple((int(r0 * 2 ** o_recip), r1 * 2 ** o_recip) for r0, r1 in base_rs)
    recip_luts = [_build_intlut(lambda x: float(2 ** o_recip) / x, r, addrwidth=8, bits=8)
                  for r in recip_rs]

    recip_alphas = tuple(int(l["alpha"]) for l in recip_luts)
    recip_betas = tuple(int(l["beta"]) for l in recip_luts)
    recip_log2denoms = tuple(int(l["log2denom"]) for l in recip_luts)
    recip_offsets = tuple(int(l["O_out"]) for l in recip_luts)
    recip_offset = max(recip_offsets)
    recip_offsets_diff = tuple(recip_offset - o for o in recip_offsets)
    recip_tables = np.stack([l["table"] for l in recip_luts]).astype(np.int32)
    trunc_mul = 12
    O_out = exp_lut["O_out"] + recip_offset - trunc_mul

    # ---- closed form used by the kernel: recip_tables[i][k] == round(N/(off+k))
    recip_num = 1 << (o_recip + recip_offsets[0] - recip_log2denoms[0])   # 8192
    recip_off = recip_alphas[0] >> recip_log2denoms[0]                    # 32
    kk = np.arange(256, dtype=np.float64)
    closed = np.clip(np.round(recip_num / (recip_off + kk)), 0, 255).astype(np.int64)
    for i in range(len(recip_luts)):
        assert recip_alphas[i] % (1 << recip_log2denoms[i]) == 0
        assert (recip_alphas[i] >> recip_log2denoms[i]) == recip_off
        assert o_recip + recip_offsets[i] - recip_log2denoms[i] == int(math.log2(recip_num))
        assert np.array_equal(recip_luts[i]["table"], closed)
    # power-of-two numerator => no exact .5 ties => nearest integer is unique
    assert recip_num & (recip_num - 1) == 0

    # ---- segment-selection / shift structure (needed by the cheap kernel path)
    nseg = len(recip_alphas)
    assert all(recip_alphas[i] < recip_alphas[i + 1] for i in range(nseg - 1))
    # contiguous coverage => "count of alphas[1:] <= t_sum" equals the reference
    # override loop for every t_sum < recip_betas[-1]  (checked per call).
    assert all(recip_alphas[i + 1] <= recip_betas[i] for i in range(nseg - 1))
    ld_step = recip_log2denoms[1] - recip_log2denoms[0]
    sh_step = recip_offsets_diff[1] - recip_offsets_diff[0]
    assert all(recip_log2denoms[i + 1] - recip_log2denoms[i] == ld_step
               for i in range(nseg - 1))
    assert all(recip_offsets_diff[i + 1] - recip_offsets_diff[i] == sh_step
               for i in range(nseg - 1))

    # ---- exp LUT breakpoint chain (exact fallback path) ----------------------
    L = exp_log2denom
    assert (255 << L) < 2 ** 31, "exp thresholds must fit in int32"
    exp_first = int(exp_table[0])
    exp_points = tuple((int(e) << L, int(exp_table[e]))
                       for e in range(1, 256) if exp_table[e] != exp_table[e - 1])

    # ---- exp LUT as bitwise square-and-multiply (fast path) ------------------
    # Target: exp_table[e] = clamp(round(2^O_out * exp(-e*denom*scale)), 0, 255).
    # Evaluate the exponential as a product over the bits of e (clamped to emax)
    # and validate the whole table bit-exactly with a float32 simulation of the
    # kernel arithmetic.  Falls back to the breakpoint chain on any mismatch.
    c = float(exp_lut["denom"]) * scale
    exp_scale = float(2 ** exp_lut["O_out"])
    nbits = 8
    for nb in range(1, 9):
        em = (1 << nb) - 1
        if np.all(exp_table[em:] == exp_table[em]):
            nbits = nb
            break
    exp_emax = (1 << nbits) - 1
    sq_on0 = float(np.float32(exp_scale * math.exp(-c)))          # scale folded in
    sq_off0 = float(np.float32(exp_scale))
    sq_factors = tuple(float(np.float32(math.exp(-float(1 << k) * c)))
                       for k in range(1, nbits))
    sq_clip = float(np.float32(2 ** exp_bits - 1))

    def _simulate_sqmul(e):
        # Bit-exact float32 mirror of the kernel's square-and-multiply path.
        e = np.minimum(np.asarray(e, dtype=np.int64), exp_emax)
        acc = np.where((e & 1) != 0, np.float32(sq_on0),
                       np.float32(sq_off0)).astype(np.float32)
        for k in range(1, nbits):
            f = np.where((e & (1 << k)) != 0, np.float32(sq_factors[k - 1]),
                         np.float32(1.0)).astype(np.float32)
            acc = (acc * f).astype(np.float32)
        acc = np.minimum(acc, np.float32(sq_clip))
        return (acc + np.float32(0.5)).astype(np.int32).astype(np.int64)

    exp_use_sqmul = bool(np.array_equal(_simulate_sqmul(np.arange(256)), exp_table))

    return dict(
        # exp LUT
        exp_log2denom=exp_log2denom,
        exp_table=exp_table,
        exp_first=exp_first,
        exp_points=exp_points,
        exp_use_sqmul=exp_use_sqmul,
        exp_emax=exp_emax,
        exp_sq_on0=sq_on0,
        exp_sq_off0=sq_off0,
        exp_sq_factors=sq_factors,
        exp_sq_clip=sq_clip,
        # reciprocal segments
        recip_alphas=recip_alphas,
        recip_betas=recip_betas,
        recip_log2denoms=recip_log2denoms,
        recip_offsets_diff=recip_offsets_diff,
        recip_tables=recip_tables,
        recip_num=recip_num,
        recip_off=recip_off,
        seg_ld0=recip_log2denoms[0],
        seg_ld_step=ld_step,
        seg_sh0=recip_offsets_diff[0],
        seg_sh_step=sh_step,
        trunc_mul=trunc_mul,
        O_out=O_out,
    )


# ---------------------------------------------------------------------------
# In-kernel block math: full IntSoftmax.forward on one row block (any rank,
# softmax over the last axis).  `t` is int32 with the mask already added.
# ---------------------------------------------------------------------------
def _softmax_block(t, cfg, use_sum_sel):
    t_max = jnp.max(t, axis=-1, keepdims=True)
    d = t_max - t                                          # >= 0

    # ---- exp LUT -----------------------------------------------------------
    if cfg["exp_use_sqmul"]:
        # exp_table[min(d >> L, emax)] as a bitwise product of f32 constants;
        # validated bit-exactly against the 256-entry table at build time.
        e = jnp.minimum(d >> cfg["exp_log2denom"], jnp.int32(cfg["exp_emax"]))
        acc = jnp.where((e & 1) != 0,
                        jnp.float32(cfg["exp_sq_on0"]),
                        jnp.float32(cfg["exp_sq_off0"]))
        for k, rk in enumerate(cfg["exp_sq_factors"], start=1):
            acc = acc * jnp.where((e & (1 << k)) != 0,
                                  jnp.float32(rk), jnp.float32(1.0))
        # float clamp doubles as the 255 saturation and keeps the final mul and
        # the +0.5 from fusing into an FMA (value-stable vs. the host check).
        acc = jnp.minimum(acc, jnp.float32(cfg["exp_sq_clip"]))
        t_exp = (acc + jnp.float32(0.5)).astype(jnp.int32)
    else:
        # Fallback: chained select over the value-change breakpoints.
        t_exp = jnp.full_like(d, jnp.int32(cfg["exp_first"]))
        for thr, val in cfg["exp_points"]:
            t_exp = jnp.where(d >= jnp.int32(thr), jnp.int32(val), t_exp)

    t_sum = jnp.sum(t_exp, axis=-1, keepdims=True)         # (rows, 1) int32

    # ---- segment selection --------------------------------------------------
    alphas, betas = cfg["recip_alphas"], cfg["recip_betas"]
    if use_sum_sel:
        # Cheap path: count of thresholds <= t_sum (equivalent to the reference
        # override loop whenever t_sum < betas[-1]; checked by the wrapper).
        sel = (t_sum >= jnp.int32(alphas[1])).astype(jnp.int32)
        for a in alphas[2:]:
            sel = sel + (t_sum >= jnp.int32(a)).astype(jnp.int32)
    else:
        # Exact reference-style masks (needed only for very large Sk).
        sel = jnp.zeros_like(t_sum)
        for i in range(len(alphas)):
            m = (t_sum >= jnp.int32(alphas[i])) & (t_sum < jnp.int32(betas[i]))
            sel = jnp.where(m, jnp.int32(i), sel)

    # Per-lane variable shifts instead of 4-deep where-chains.
    ldv = jnp.int32(cfg["seg_ld0"]) + jnp.int32(cfg["seg_ld_step"]) * sel
    shv = jnp.int32(cfg["seg_sh0"]) + jnp.int32(cfg["seg_sh_step"]) * sel

    # ---- reciprocal: rec = clamp(round(recip_num / x), 0, 255) --------------
    # x = recip_off + clip((t_sum - alpha_sel) >> ld_sel, 0, 255)
    #   = clip(t_sum >> ld_sel, off, off + 255)   (alpha_sel = off << ld_sel)
    off = int(cfg["recip_off"])
    x = jnp.clip(t_sum >> ldv, off, off + 255)
    xf = x.astype(jnp.float32)
    qf = pl.reciprocal(xf, approx=True)                     # EUP slot
    qf = qf * (jnp.float32(2.0) - xf * qf)                  # one Newton step
    qf = qf * jnp.float32(cfg["recip_num"]) + jnp.float32(0.5)
    q = qf.astype(jnp.int32)
    # Exact +-1 nearest-integer correction (q is provably within 1 of round()).
    r2 = (jnp.int32(cfg["recip_num"]) - q * x) * 2
    q = q + (r2 >= x).astype(jnp.int32) - (r2 < -x).astype(jnp.int32)
    rec = jnp.clip(q, 0, 255)
    rec_s = rec << shv

    # t_softmax = (t_exp * t_recip) >> Trunc_mul   (fits int32: <= 255*(255<<9))
    return (t_exp * rec_s) >> cfg["trunc_mul"]


# ---------------------------------------------------------------------------
# Row-block heuristic: ~1 MiB int32 tiles, but never fewer than ~8 total grid
# steps (so the BlockSpec pipeline overlaps and megacore can shard).
# ---------------------------------------------------------------------------
def _pick_rows_block(nrows, ncols, other_steps=1, override=None,
                     target_bytes=1 << 20, min_total_steps=8):
    if override is not None:
        bm = min(int(override), nrows)
        if bm < nrows:
            bm = max(8, (bm // 8) * 8)
        return bm
    if nrows <= 8:
        return nrows
    cap_mem = max(8, (target_bytes // (4 * ncols)) // 8 * 8)
    want_steps = max(1, -(-min_total_steps // max(1, other_steps)))
    cap_split = max(8, (-(-nrows // want_steps) + 7) // 8 * 8)
    bm = min(cap_mem, cap_split)
    return nrows if bm >= nrows else bm


# ---------------------------------------------------------------------------
# Wrapper
# ---------------------------------------------------------------------------
def make_int_softmax(cfg, block_rows=None):
    exp_max = int(cfg["exp_table"].max())

    def _call(kernel, inputs, in_specs, out_spec, out_shape, grid):
        return pl.pallas_call(
            kernel,
            out_shape=out_shape,
            grid_spec=pltpu.PrefetchScalarGridSpec(
                num_scalar_prefetch=0,
                grid=grid,
                in_specs=in_specs,
                out_specs=out_spec,
            ),
            compiler_params=pltpu.CompilerParams(
                dimension_semantics=("parallel",) * len(grid),
                vmem_limit_bytes=32 * 1024 * 1024,      # v7x-safe ceiling
            ),
        )(*inputs)

    def forward(t, mask=None):
        t = t.astype(jnp.int32)
        squeeze0 = False
        if t.ndim == 1:
            t = t[None, :]
            squeeze0 = True
        sk = t.shape[-1]
        # t_sum <= exp_max * Sk; when strictly below the last segment's beta the
        # cheap "count of alphas" selection is exactly the reference semantics.
        use_sum_sel = exp_max * sk < cfg["recip_betas"][-1]

        if mask is None:
            # No mask: collapse every leading dim into rows -> big lane-dense tiles.
            rows = math.prod(t.shape[:-1])
            t2 = t.reshape(rows, sk)
            tm = _pick_rows_block(rows, sk, other_steps=1, override=block_rows)
            grid = (pl.cdiv(rows, tm),)

            def kernel(t_ref, o_ref):
                o_ref[...] = _softmax_block(t_ref[...], cfg, use_sum_sel)

            out = _call(
                kernel, (t2,),
                [pl.BlockSpec((tm, sk), lambda i: (i, 0))],
                pl.BlockSpec((tm, sk), lambda i: (i, 0)),
                jax.ShapeDtypeStruct((rows, sk), jnp.int32),
                grid)
            out = out.reshape(t.shape)
        else:
            # Fused-mask path: keep t's structure so the mask's broadcast dims
            # (e.g. the head dim of a (B,1,Q,K) mask) are never materialized.
            m = mask.astype(jnp.int32)
            if m.ndim < t.ndim:
                m = m.reshape((1,) * (t.ndim - m.ndim) + m.shape)
            assert m.ndim == t.ndim
            for a, b in zip(m.shape, t.shape):
                assert a in (1, b), "mask must be broadcastable to the logits"

            lead = t.shape[:-2]
            nlead = len(lead)
            q = t.shape[-2]
            lead_steps = int(np.prod(lead)) if lead else 1
            tq = _pick_rows_block(q, sk, other_steps=lead_steps, override=block_rows)
            grid = tuple(lead) + (pl.cdiv(q, tq),)

            t_block = (1,) * nlead + (tq, sk)

            def t_imap(*idx):
                return tuple(idx[:nlead]) + (idx[nlead], 0)

            m_shape = m.shape
            m_block = (1,) * nlead + (tq if m_shape[-2] == q else 1,
                                      sk if m_shape[-1] == sk else 1)

            def m_imap(*idx):
                out_idx = [idx[d] if m_shape[d] != 1 else 0 for d in range(nlead)]
                out_idx.append(idx[nlead] if m_shape[-2] != 1 else 0)
                out_idx.append(0)
                return tuple(out_idx)

            def kernel(t_ref, m_ref, o_ref):
                o_ref[...] = _softmax_block(t_ref[...] + m_ref[...], cfg, use_sum_sel)

            out = _call(
                kernel, (t, m),
                [pl.BlockSpec(t_block, t_imap), pl.BlockSpec(m_block, m_imap)],
                pl.BlockSpec(t_block, t_imap),
                jax.ShapeDtypeStruct(t.shape, jnp.int32),
                grid)

        if squeeze0:
            out = out[0]
        return out

    return forward


# ---------------------------------------------------------------------------
# Pure-JAX reference (direct transcription of IntSoftmax.forward, table gathers)
# ---------------------------------------------------------------------------
def int_softmax_reference(t, mask, cfg):
    t = t.astype(jnp.int32)
    if mask is not None:
        t = t + mask.astype(jnp.int32)
    t_max = jnp.max(t, axis=-1, keepdims=True)
    idx = jnp.clip((t_max - t) >> cfg["exp_log2denom"], 0, 255)
    exp_tab = jnp.asarray(cfg["exp_table"], dtype=jnp.int32)
    te = exp_tab[idx]
    ts = jnp.sum(te, axis=-1, keepdims=True)

    sel = jnp.zeros_like(ts)
    for i in range(4):
        m = (ts >= cfg["recip_alphas"][i]) & (ts < cfg["recip_betas"][i])
        sel = jnp.where(m, i, sel)
    alphas = jnp.asarray(cfg["recip_alphas"], dtype=jnp.int32)
    lds = jnp.asarray(cfg["recip_log2denoms"], dtype=jnp.int32)
    offd = jnp.asarray(cfg["recip_offsets_diff"], dtype=jnp.int32)
    tabs = jnp.asarray(cfg["recip_tables"], dtype=jnp.int32)

    k = jnp.clip((ts - alphas[sel]) >> lds[sel], 0, 255)
    trec = jnp.zeros_like(ts)
    for i in range(4):
        trec = jnp.where(sel == i, tabs[i][k], trec)
    trec = trec << offd[sel]
    return (te * trec) >> cfg["trunc_mul"]


# ---------------------------------------------------------------------------
# Demo / self-check
# ---------------------------------------------------------------------------
if __name__ == "__main__":
    cfg = build_int_softmax_config(head_dim=32, O_in=4)
    fwd = jax.jit(make_int_softmax(cfg))

    key = jax.random.PRNGKey(0)
    k1, k2, k3, k4 = jax.random.split(key, 4)

    # 1) (batch, heads, q_len, k_len) quantized logits + additive int mask that
    #    broadcasts over heads -> fused-mask path, grid (B, H, Q_blocks).
    x = jax.random.randint(k1, (2, 4, 16, 128), -1500, 1500, dtype=jnp.int32)
    mask = jnp.where(jax.random.bernoulli(k2, 0.2, (2, 1, 16, 128)),
                     jnp.int32(-(1 << 20)), jnp.int32(0))
    out = fwd(x, mask)
    jax.block_until_ready(out)
    ref = int_softmax_reference(x, mask, cfg)
    np.testing.assert_array_equal(np.asarray(out), np.asarray(ref))
    assert out.shape == x.shape and out.dtype == jnp.int32

    # 2) no mask -> collapsed-rows path; multi-step grid with a ragged last
    #    block and a non-128 lane width.
    x2 = jax.random.randint(k3, (2, 3, 10, 96), -3000, 3000, dtype=jnp.int32)
    out2 = fwd(x2)
    jax.block_until_ready(out2)
    np.testing.assert_array_equal(np.asarray(out2),
                                  np.asarray(int_softmax_reference(x2, None, cfg)))

    # 3) fused mask + ragged Q blocks + broadcast mask + non-128 lanes.
    x3 = jax.random.randint(k4, (2, 3, 10, 96), -3000, 3000, dtype=jnp.int32)
    mask3 = jnp.where(jax.random.bernoulli(k2, 0.25, (2, 1, 10, 96)),
                      jnp.int32(-(1 << 20)), jnp.int32(0))
    out3 = fwd(x3, mask3)
    jax.block_until_ready(out3)
    np.testing.assert_array_equal(np.asarray(out3),
                                  np.asarray(int_softmax_reference(x3, mask3, cfg)))

    # TODO(synk): optional int16 output (values <= ~8.2k) if downstream accepts
    # it, to halve writeback bytes on v5e.
    print("KERNEL_OK")
</pallas_src>

<mosaic_0001>
module attributes {stable_mosaic.version = 11 : i64} {
  func.func @kernel(%arg0: i32, %arg1: i32, %arg2: i32, %arg3: memref<1x1x16x128xi32, #tpu.memory_space<vmem>>, %arg4: memref<1x1x16x128xi32, #tpu.memory_space<vmem>>, %arg5: memref<1x1x16x128xi32, #tpu.memory_space<vmem>>) attributes {dimension_semantics = [#tpu.dimension_semantics<parallel>, #tpu.dimension_semantics<parallel>, #tpu.dimension_semantics<parallel>], iteration_bounds = array<i64: 2, 4, 1>, scalar_prefetch = 0 : i64, scratch_operands = 0 : i64, tpu.core_type = #tpu.core_type<tc>, window_params = [{transform_indices = @transform_0, window_bounds = array<i64: 1, 1, 16, 128>}, {transform_indices = @transform_1, window_bounds = array<i64: 1, 1, 16, 128>}, {transform_indices = @transform_2, window_bounds = array<i64: 1, 1, 16, 128>}]} {
    %c0 = arith.constant 0 : index
    %c0_0 = arith.constant 0 : index
    %c0_1 = arith.constant 0 : index
    %c0_2 = arith.constant 0 : index
    %0 = vector.load %arg3[%c0, %c0_0, %c0_1, %c0_2] : memref<1x1x16x128xi32, #tpu.memory_space<vmem>>, vector<1x1x16x128xi32>
    %c0_3 = arith.constant 0 : index
    %c0_4 = arith.constant 0 : index
    %c0_5 = arith.constant 0 : index
    %c0_6 = arith.constant 0 : index
    %1 = vector.load %arg4[%c0_3, %c0_4, %c0_5, %c0_6] : memref<1x1x16x128xi32, #tpu.memory_space<vmem>>, vector<1x1x16x128xi32>
    %2 = arith.addi %0, %1 : vector<1x1x16x128xi32>
    %cst = arith.constant dense<-2147483648> : vector<1x1x16xi32>
    %3 = vector.multi_reduction <maxsi>, %2, %cst [3] : vector<1x1x16x128xi32> to vector<1x1x16xi32>
    %4 = vector.shape_cast %3 : vector<1x1x16xi32> to vector<1x1x16x1xi32>
    %5 = vector.broadcast %4 : vector<1x1x16x1xi32> to vector<1x1x16x128xi32>
    %6 = arith.subi %5, %2 : vector<1x1x16x128xi32>
    %c4_i32 = arith.constant 4 : i32
    %7 = vector.broadcast %c4_i32 : i32 to vector<1x1x16x128xi32>
    %8 = arith.shrsi %6, %7 : vector<1x1x16x128xi32>
    %c63_i32 = arith.constant 63 : i32
    %9 = vector.broadcast %c63_i32 : i32 to vector<1x1x16x128xi32>
    %10 = arith.minsi %8, %9 : vector<1x1x16x128xi32>
    %c1_i32 = arith.constant 1 : i32
    %11 = vector.broadcast %c1_i32 : i32 to vector<1x1x16x128xi32>
    %12 = arith.andi %10, %11 : vector<1x1x16x128xi32>
    %c0_i32 = arith.constant 0 : i32
    %13 = vector.broadcast %c0_i32 : i32 to vector<1x1x16x128xi32>
    %14 = arith.cmpi ne, %12, %13 : vector<1x1x16x128xi32>
    %cst_7 = arith.constant 214.519516 : f32
    %cst_8 = arith.constant 2.560000e+02 : f32
    %15 = vector.broadcast %cst_7 : f32 to vector<1x1x16x128xf32>
    %16 = vector.broadcast %cst_8 : f32 to vector<1x1x16x128xf32>
    %17 = arith.select %14, %15, %16 : vector<1x1x16x128xi1>, vector<1x1x16x128xf32>
    %c2_i32 = arith.constant 2 : i32
    %18 = vector.broadcast %c2_i32 : i32 to vector<1x1x16x128xi32>
    %19 = arith.andi %10, %18 : vector<1x1x16x128xi32>
    %c0_i32_9 = arith.constant 0 : i32
    %20 = vector.broadcast %c0_i32_9 : i32 to vector<1x1x16x128xi32>
    %21 = arith.cmpi ne, %19, %20 : vector<1x1x16x128xi32>
    %cst_10 = arith.constant 0.702188492 : f32
    %cst_11 = arith.constant 1.000000e+00 : f32
    %22 = vector.broadcast %cst_10 : f32 to vector<1x1x16x128xf32>
    %23 = vector.broadcast %cst_11 : f32 to vector<1x1x16x128xf32>
    %24 = arith.select %21, %22, %23 : vector<1x1x16x128xi1>, vector<1x1x16x128xf32>
    %25 = arith.mulf %17, %24 : vector<1x1x16x128xf32>
    %c4_i32_12 = arith.constant 4 : i32
    %26 = vector.broadcast %c4_i32_12 : i32 to vector<1x1x16x128xi32>
    %27 = arith.andi %10, %26 : vector<1x1x16x128xi32>
    %c0_i32_13 = arith.constant 0 : i32
    %28 = vector.broadcast %c0_i32_13 : i32 to vector<1x1x16x128xi32>
    %29 = arith.cmpi ne, %27, %28 : vector<1x1x16x128xi32>
    %cst_14 = arith.constant 0.493068695 : f32
    %cst_15 = arith.constant 1.000000e+00 : f32
    %30 = vector.broadcast %cst_14 : f32 to vector<1x1x16x128xf32>
    %31 = vector.broadcast %cst_15 : f32 to vector<1x1x16x128xf32>
    %32 = arith.select %29, %30, %31 : vector<1x1x16x128xi1>, vector<1x1x16x128xf32>
    %33 = arith.mulf %25, %32 : vector<1x1x16x128xf32>
    %c8_i32 = arith.constant 8 : i32
    %34 = vector.broadcast %c8_i32 : i32 to vector<1x1x16x128xi32>
    %35 = arith.andi %10, %34 : vector<1x1x16x128xi32>
    %c0_i32_16 = arith.constant 0 : i32
    %36 = vector.broadcast %c0_i32_16 : i32 to vector<1x1x16x128xi32>
    %37 = arith.cmpi ne, %35, %36 : vector<1x1x16x128xi32>
    %cst_17 = arith.constant 0.243116736 : f32
    %cst_18 = arith.constant 1.000000e+00 : f32
    %38 = vector.broadcast %cst_17 : f32 to vector<1x1x16x128xf32>
    %39 = vector.broadcast %cst_18 : f32 to vector<1x1x16x128xf32>
    %40 = arith.select %37, %38, %39 : vector<1x1x16x128xi1>, vector<1x1x16x128xf32>
    %41 = arith.mulf %33, %40 : vector<1x1x16x128xf32>
    %c16_i32 = arith.constant 16 : i32
    %42 = vector.broadcast %c16_i32 : i32 to vector<1x1x16x128xi32>
    %43 = arith.andi %10, %42 : vector<1x1x16x128xi32>
    %c0_i32_19 = arith.constant 0 : i32
    %44 = vector.broadcast %c0_i32_19 : i32 to vector<1x1x16x128xi32>
    %45 = arith.cmpi ne, %43, %44 : vector<1x1x16x128xi32>
    %cst_20 = arith.constant 0.0591057464 : f32
    %cst_21 = arith.constant 1.000000e+00 : f32
    %46 = vector.broadcast %cst_20 : f32 to vector<1x1x16x128xf32>
    %47 = vector.broadcast %cst_21 : f32 to vector<1x1x16x128xf32>
    %48 = arith.select %45, %46, %47 : vector<1x1x16x128xi1>, vector<1x1x16x128xf32>
    %49 = arith.mulf %41, %48 : vector<1x1x16x128xf32>
    %c32_i32 = arith.constant 32 : i32
    %50 = vector.broadcast %c32_i32 : i32 to vector<1x1x16x128xi32>
    %51 = arith.andi %10, %50 : vector<1x1x16x128xi32>
    %c0_i32_22 = arith.constant 0 : i32
    %52 = vector.broadcast %c0_i32_22 : i32 to vector<1x1x16x128xi32>
    %53 = arith.cmpi ne, %51, %52 : vector<1x1x16x128xi32>
    %cst_23 = arith.constant 0.00349348923 : f32
    %cst_24 = arith.constant 1.000000e+00 : f32
    %54 = vector.broadcast %cst_23 : f32 to vector<1x1x16x128xf32>
    %55 = vector.broadcast %cst_24 : f32 to vector<1x1x16x128xf32>
    %56 = arith.select %53, %54, %55 : vector<1x1x16x128xi1>, vector<1x1x16x128xf32>
    %57 = arith.mulf %49, %56 : vector<1x1x16x128xf32>
    %cst_25 = arith.constant 2.550000e+02 : f32
    %58 = vector.broadcast %cst_25 : f32 to vector<1x1x16x128xf32>
    %59 = arith.minimumf %57, %58 : vector<1x1x16x128xf32>
    %cst_26 = arith.constant 5.000000e-01 : f32
    %60 = vector.broadcast %cst_26 : f32 to vector<1x1x16x128xf32>
    %61 = arith.addf %59, %60 : vector<1x1x16x128xf32>
    %62 = arith.fptosi %61 : vector<1x1x16x128xf32> to vector<1x1x16x128xi32>
    %cst_27 = arith.constant dense<0> : vector<1x1x16xi32>
    %63 = vector.multi_reduction <add>, %62, %cst_27 [3] : vector<1x1x16x128xi32> to vector<1x1x16xi32>
    %64 = vector.shape_cast %63 : vector<1x1x16xi32> to vector<1x1x16x1xi32>
    %c2048_i32 = arith.constant 2048 : i32
    %65 = vector.broadcast %c2048_i32 : i32 to vector<1x1x16x1xi32>
    %66 = arith.cmpi sge, %64, %65 : vector<1x1x16x1xi32>
    %67 = arith.extui %66 : vector<1x1x16x1xi1> to vector<1x1x16x1xi32>
    %c16384_i32 = arith.constant 16384 : i32
    %68 = vector.broadcast %c16384_i32 : i32 to vector<1x1x16x1xi32>
    %69 = arith.cmpi sge, %64, %68 : vector<1x1x16x1xi32>
    %70 = arith.extui %69 : vector<1x1x16x1xi1> to vector<1x1x16x1xi32>
    %71 = arith.addi %67, %70 : vector<1x1x16x1xi32>
    %c131072_i32 = arith.constant 131072 : i32
    %72 = vector.broadcast %c131072_i32 : i32 to vector<1x1x16x1xi32>
    %73 = arith.cmpi sge, %64, %72 : vector<1x1x16x1xi32>
    %74 = arith.extui %73 : vector<1x1x16x1xi1> to vector<1x1x16x1xi32>
    %75 = arith.addi %71, %74 : vector<1x1x16x1xi32>
    %c3_i32 = arith.constant 3 : i32
    %76 = vector.broadcast %c3_i32 : i32 to vector<1x1x16x1xi32>
    %77 = arith.muli %76, %75 : vector<1x1x16x1xi32>
    %c3_i32_28 = arith.constant 3 : i32
    %78 = vector.broadcast %c3_i32_28 : i32 to vector<1x1x16x1xi32>
    %79 = arith.addi %78, %77 : vector<1x1x16x1xi32>
    %c-3_i32 = arith.constant -3 : i32
    %80 = vector.broadcast %c-3_i32 : i32 to vector<1x1x16x1xi32>
    %81 = arith.muli %80, %75 : vector<1x1x16x1xi32>
    %c9_i32 = arith.constant 9 : i32
    %82 = vector.broadcast %c9_i32 : i32 to vector<1x1x16x1xi32>
    %83 = arith.addi %82, %81 : vector<1x1x16x1xi32>
    %84 = arith.shrsi %64, %79 : vector<1x1x16x1xi32>
    %c32_i32_29 = arith.constant 32 : i32
    %c287_i32 = arith.constant 287 : i32
    %85 = vector.broadcast %c32_i32_29 : i32 to vector<1x1x16x1xi32>
    %86 = arith.maxsi %85, %84 : vector<1x1x16x1xi32>
    %87 = vector.broadcast %c287_i32 : i32 to vector<1x1x16x1xi32>
    %88 = arith.minsi %87, %86 : vector<1x1x16x1xi32>
    %89 = arith.sitofp %88 : vector<1x1x16x1xi32> to vector<1x1x16x1xf32>
    %90 = tpu.reciprocal %89 {approx = true} : vector<1x1x16x1xf32> -> vector<1x1x16x1xf32>
    %91 = arith.mulf %89, %90 : vector<1x1x16x1xf32>
    %cst_30 = arith.constant 2.000000e+00 : f32
    %92 = vector.broadcast %cst_30 : f32 to vector<1x1x16x1xf32>
    %93 = arith.subf %92, %91 : vector<1x1x16x1xf32>
    %94 = arith.mulf %90, %93 : vector<1x1x16x1xf32>
    %cst_31 = arith.constant 8.192000e+03 : f32
    %95 = vector.broadcast %cst_31 : f32 to vector<1x1x16x1xf32>
    %96 = arith.mulf %94, %95 : vector<1x1x16x1xf32>
    %cst_32 = arith.constant 5.000000e-01 : f32
    %97 = vector.broadcast %cst_32 : f32 to vector<1x1x16x1xf32>
    %98 = arith.addf %96, %97 : vector<1x1x16x1xf32>
    %99 = arith.fptosi %98 : vector<1x1x16x1xf32> to vector<1x1x16x1xi32>
    %100 = arith.muli %99, %88 : vector<1x1x16x1xi32>
    %c8192_i32 = arith.constant 8192 : i32
    %101 = vector.broadcast %c8192_i32 : i32 to vector<1x1x16x1xi32>
    %102 = arith.subi %101, %100 : vector<1x1x16x1xi32>
    %c2_i32_33 = arith.constant 2 : i32
    %103 = vector.broadcast %c2_i32_33 : i32 to vector<1x1x16x1xi32>
    %104 = arith.muli %102, %103 : vector<1x1x16x1xi32>
    %105 = arith.cmpi sge, %104, %88 : vector<1x1x16x1xi32>
    %106 = arith.extui %105 : vector<1x1x16x1xi1> to vector<1x1x16x1xi32>
    %107 = arith.addi %99, %106 : vector<1x1x16x1xi32>
    %c0_i32_34 = arith.constant 0 : i32
    %108 = vector.broadcast %c0_i32_34 : i32 to vector<1x1x16x1xi32>
    %109 = arith.subi %108, %88 : vector<1x1x16x1xi32>
    %110 = arith.cmpi slt, %104, %109 : vector<1x1x16x1xi32>
    %111 = arith.extui %110 : vector<1x1x16x1xi1> to vector<1x1x16x1xi32>
    %112 = arith.subi %107, %111 : vector<1x1x16x1xi32>
    %c0_i32_35 = arith.constant 0 : i32
    %c255_i32 = arith.constant 255 : i32
    %113 = vector.broadcast %c0_i32_35 : i32 to vector<1x1x16x1xi32>
    %114 = arith.maxsi %113, %112 : vector<1x1x16x1xi32>
    %115 = vector.broadcast %c255_i32 : i32 to vector<1x1x16x1xi32>
    %116 = arith.minsi %115, %114 : vector<1x1x16x1xi32>
    %117 = arith.shli %116, %83 : vector<1x1x16x1xi32>
    %118 = vector.broadcast %117 : vector<1x1x16x1xi32> to vector<1x1x16x128xi32>
    %119 = arith.muli %62, %118 : vector<1x1x16x128xi32>
    %c12_i32 = arith.constant 12 : i32
    %120 = vector.broadcast %c12_i32 : i32 to vector<1x1x16x128xi32>
    %121 = arith.shrsi %119, %120 : vector<1x1x16x128xi32>
    %c0_36 = arith.constant 0 : index
    %c0_37 = arith.constant 0 : index
    %c0_38 = arith.constant 0 : index
    %c0_39 = arith.constant 0 : index
    %122 = vector.load %arg5[%c0_36, %c0_37, %c0_38, %c0_39] : memref<1x1x16x128xi32, #tpu.memory_space<vmem>>, vector<1x1x16x128xi32>
    tpu.vector_store %arg5[%c0_36, %c0_37, %c0_38, %c0_39], %121 {strides = array<i32>} : memref<1x1x16x128xi32, #tpu.memory_space<vmem>>, vector<1x1x16x128xi32>,
    return
  }
  func.func @transform_0(%arg0: i32, %arg1: i32, %arg2: i32) -> (i32, i32, i32, i32) {
    %c0_i32 = arith.constant 0 : i32
    %c0_i32_0 = arith.constant 0 : i32
    return %arg0, %arg1, %arg2, %c0_i32 : i32, i32, i32, i32
  }
  func.func @transform_1(%arg0: i32, %arg1: i32, %arg2: i32) -> (i32, i32, i32, i32) {
    %c0_i32 = arith.constant 0 : i32
    %c0_i32_0 = arith.constant 0 : i32
    %c0_i32_1 = arith.constant 0 : i32
    return %arg0, %c0_i32, %arg2, %c0_i32_0 : i32, i32, i32, i32
  }
  func.func @transform_2(%arg0: i32, %arg1: i32, %arg2: i32) -> (i32, i32, i32, i32) {
    %c0_i32 = arith.constant 0 : i32
    %c0_i32_0 = arith.constant 0 : i32
    return %arg0, %arg1, %arg2, %c0_i32 : i32, i32, i32, i32
  }
}

</mosaic_0001>

<llo_original>
// kernel: forward.1
$region0: #{forward.1}
  #allocation0 [shape = 'u32[]', space=smem, size = 0x4, offset = 0x4, fixed_abs, tag = 'smem constant byte address 0x4 - core index']
  #allocation1 [shape = 'u32[144,128]{1,0:T(1,128)}', space=vmem, size = 0x12000, scoped, tag = 'internal scratch']
  %s0 = inlined_call_operand.hbm [shape: s32[2,4,16,128], index: 0, kind: input, shape index: {}]
  %s1 = inlined_call_operand.hbm [shape: s32[2,1,16,128], index: 1, kind: input, shape index: {}]
  %s2 = inlined_call_operand.hbm [shape: s32[2,4,16,128], index: 2, kind: output, shape index: {}]
  %s3 = sld [smem:[#allocation0]]
  $region49: #{forward.1} parent=0
    _
  %s5 = ssub.s32 1, %s3
  %s6 = scalar_select 0, %s5, %s3
  $region1: #{forward.1} parent=0
    #allocation2 [shape = 'u8[16384]{0}', space=vmem, size = 0x4000, scoped, tag = 'input window, operand 0']
    #allocation3 [shape = 's32[2]{0}', space=sflag, size = 0x8, scoped, tag = 'scoped memory for forward.1']
    #allocation4 [shape = 's32[2]{0}', space=sflag, size = 0x8, scoped, tag = 'scoped memory for forward.1']
    #allocation5 [shape = 'u8[16384]{0}', space=vmem, size = 0x4000, scoped, tag = 'input window, operand 1']
    #allocation6 [shape = 's32[2]{0}', space=sflag, size = 0x8, scoped, tag = 'scoped memory for forward.1']
    #allocation7 [shape = 'u8[16384]{0}', space=vmem, size = 0x4000, scoped, tag = 'output window, operand 0']
    %7 = vsyncpa [#allocation3], 0
    %s8 = scalar_lea.sflag [#allocation3], 1
    %9 = vsyncpa %s8, 0
    %10 = vsyncpa [#allocation6], 0
    %s11 = scalar_lea.sflag [#allocation6], 1
    %12 = vsyncpa %s11, 0
    %13 = vsyncpa [#allocation4], 0
    %s14 = scalar_lea.sflag [#allocation4], 1
    %15 = vsyncpa %s14, 0
    loop: start=0, step=1, limit=10
    $region2: #{forward.1} parent=1 // loop_pre_header
      _
    $region3: #{forward.1} parent=1 // loop_header
      %s17 = sphi 0, %s21
      %p18 = scmp.ge.s32.totalorder %s17, 10
      %s24 = sphi 0, %s43
      %s25 = sphi 0, %s39
      %s26 = sphi 0, %s35
      %s27 = sphi 0, %s24
      %s28 = sphi 0, %s25
      %s29 = sphi 0, %s26
      %s30 = sphi 0, %s27
      %s31 = sphi 0, %s28
      %s32 = sphi 0, %s29
      %s50 = sphi 0, %s52
      %s53 = sphi 0, %s50
      %s54 = sphi 0, %s53
      %s70 = sphi 0, %s54
      %s78 = sphi 0, %s80
      %s81 = sphi 0, %s78
      %s82 = sphi 0, %s81
      %s98 = sphi 0, %s82
      %s108 = sphi 0, %s110
      %s111 = sphi 0, %s108
      %s112 = sphi 0, %s111
      %s128 = sphi 0, %s112
    $region4: #{forward.1} parent=1 // loop_header_branch
      %20 = sbr.rel (%p18) target = $region8
    $region5: #{forward.1} parent=1 // loop_body
      %s22 = ssub.s32 %s17, 1
      %s23 = ssub.s32 %s17, 2
      %s33 = sadd.s32 1, %s26
      %p34 = scmp.ge.s32.totalorder %s33, 1
      %s35 = scalar_select %p34, 0, %s33
      %s36 = sadd.s32 1, %s25
      %s37 = scalar_select %p34, %s36, %s25
      %p38 = scmp.ge.s32.totalorder %s37, 4
      %s39 = scalar_select %p38, 0, %s37
      %s40 = sadd.s32 1, %s24
      %s41 = scalar_select %p38, %s40, %s24
      %p42 = scmp.ge.s32.totalorder %s41, 2
      %s43 = scalar_select %p42, 0, %s41
      %s44 = ssub.s32 %s24, %s43
      %s45 = ssub.s32 %s25, %s39
      %s46 = sor.u32 %s44, %s45
      %s47 = ssub.s32 %s26, %s35
      %s48 = sor.u32 %s46, %s47
      %p49 = scmp.eq.s32.totalorder %s48, 0
      %s51 = sadd.s32 %s50, 1
      %s52 = scalar_select %p49, %s50, %s51
      %p55 = pneg %p49
      %p56 = scmp.eq.s32.totalorder %s17, 7
      %p57 = por %p55, %p56
      %p58 = scmp.ne.s32.totalorder %s50, %s53
      %p59 = scmp.eq.s32.totalorder %s17, 0
      %p60 = por %p58, %p59
      %p61 = scmp.ne.s32.totalorder %s50, %s53
      %p62 = scmp.eq.s32.totalorder %s22, 7
      %p63 = por %p61, %p62
      %p64 = scmp.ne.s32.totalorder %s53, %s54
      %p65 = scmp.eq.s32.totalorder %s22, 0
      %p66 = por %p64, %p65
      %p67 = scmp.ne.s32.totalorder %s53, %s54
      %p68 = scmp.eq.s32.totalorder %s23, 7
      %p69 = por %p67, %p68
      %p71 = scmp.ne.s32.totalorder %s54, %s70
      %p72 = scmp.eq.s32.totalorder %s23, 0
      %p73 = por %p71, %p72
      %s74 = ssub.s32 %s24, %s43
      %s75 = ssub.s32 %s26, %s35
      %s76 = sor.u32 %s74, %s75
      %p77 = scmp.eq.s32.totalorder %s76, 0
      %s79 = sadd.s32 %s78, 1
      %s80 = scalar_select %p77, %s78, %s79
      %p83 = pneg %p77
      %p84 = scmp.eq.s32.totalorder %s17, 7
      %p85 = por %p83, %p84
      %p86 = scmp.ne.s32.totalorder %s78, %s81
      %p87 = scmp.eq.s32.totalorder %s17, 0
      %p88 = por %p86, %p87
      %p89 = scmp.ne.s32.totalorder %s78, %s81
      %p90 = scmp.eq.s32.totalorder %s22, 7
      %p91 = por %p89, %p90
      %p92 = scmp.ne.s32.totalorder %s81, %s82
      %p93 = scmp.eq.s32.totalorder %s22, 0
      %p94 = por %p92, %p93
      %p95 = scmp.ne.s32.totalorder %s81, %s82
      %p96 = scmp.eq.s32.totalorder %s23, 7
      %p97 = por %p95, %p96
      %p99 = scmp.ne.s32.totalorder %s82, %s98
      %p100 = scmp.eq.s32.totalorder %s23, 0
      %p101 = por %p99, %p100
      %s102 = ssub.s32 %s24, %s43
      %s103 = ssub.s32 %s25, %s39
      %s104 = sor.u32 %s102, %s103
      %s105 = ssub.s32 %s26, %s35
      %s106 = sor.u32 %s104, %s105
      %p107 = scmp.eq.s32.totalorder %s106, 0
      %s109 = sadd.s32 %s108, 1
      %s110 = scalar_select %p107, %s108, %s109
      %p113 = pneg %p107
      %p114 = scmp.eq.s32.totalorder %s17, 7
      %p115 = por %p113, %p114
      %p116 = scmp.ne.s32.totalorder %s108, %s111
      %p117 = scmp.eq.s32.totalorder %s17, 0
      %p118 = por %p116, %p117
      %p119 = scmp.ne.s32.totalorder %s108, %s111
      %p120 = scmp.eq.s32.totalorder %s22, 7
      %p121 = por %p119, %p120
      %p122 = scmp.ne.s32.totalorder %s111, %s112
      %p123 = scmp.eq.s32.totalorder %s22, 0
      %p124 = por %p122, %p123
      %p125 = scmp.ne.s32.totalorder %s111, %s112
      %p126 = scmp.eq.s32.totalorder %s23, 7
      %p127 = por %p125, %p126
      %p129 = scmp.ne.s32.totalorder %s112, %s128
      %p130 = scmp.eq.s32.totalorder %s23, 0
      %p131 = por %p129, %p130
      %p132 = scmp.le.s32.totalorder 1, %s17
      %p133 = scmp.lt.s32.totalorder %s17, 9
      %p134 = pnand %p132, %p133
      %p135 = pneg %p134
      // Predicated region
      $region9: #{forward.1} parent=5 // pred_check
        _
      $region10: #{forward.1} parent=5 // pred_check_branch
        %137 = sbr.rel (%p134) target = $region12
      $region11: #{forward.1} parent=5 // pred_region
        %s138 = ssub.s32 %s17, 1
      $region12: #{forward.1} parent=5 // pred_fallthru
        _
      %p139 = scmp.lt.s32.totalorder %s17, 8
      // Predicated region
      $region13: #{forward.1} parent=5 // pred_check
        %p140 = pneg %p139
      $region14: #{forward.1} parent=5 // pred_check_branch
        %142 = sbr.rel (%p140) target = $region16
      $region15: #{forward.1} parent=5 // pred_region
        // Predicated region
        $region17: #{forward.1} parent=15 // pred_check
          %p143 = pneg %p60
        $region18: #{forward.1} parent=15 // pred_check_branch
          %145 = sbr.rel (%p143) target = $region20
        $region19: #{forward.1} parent=15 // pred_region
          %s146 = sand.u32 %s50, 1
          %s147 = scalar_lea.sflag [#allocation3], %s146
          %s148 = sand.u32 %s50, 1
          %s149 = smul.addr %s148, 16
          %s150 = scalar_lea.vmem [#allocation2], %s149
          %s151 = smul.u32 2, %s26
          %s153 = ssub.s32 256, 256
          %154 = vsyncadd %s147, %s153
          %s155 = smul.addr %s25, 2
          %s156 = sadd.s32 %s151, %s155
          %s157 = smul.addr %s24, 8
          %s158 = sadd.s32 %s156, %s157
          %s159 = smul.addr %s158, 128
          %s160 = scalar_lea.hbm %s0, %s159
          %s161 = sshll.u32 %s150, 4
          %s162 = int_to_ptr.vmem [resolvable:$true] %s161
          %167 = dma.hbm_to_vmem [thread:$0]  %s160, 256, %s162, %s147, 128, 128, 8
        $region20: #{forward.1} parent=15 // pred_fallthru
          _
        // Predicated region
        $region21: #{forward.1} parent=15 // pred_check
          %p168 = pneg %p88
        $region22: #{forward.1} parent=15 // pred_check_branch
          %170 = sbr.rel (%p168) target = $region24
        $region23: #{forward.1} parent=15 // pred_region
          %s171 = sand.u32 %s78, 1
          %s172 = scalar_lea.sflag [#allocation6], %s171
          %s173 = sand.u32 %s78, 1
          %s174 = smul.addr %s173, 16
          %s175 = scalar_lea.vmem [#allocation5], %s174
          %s176 = smul.u32 2, %s26
          %s178 = ssub.s32 256, 256
          %179 = vsyncadd %s172, %s178
          %s180 = smul.addr %s24, 2
          %s181 = sadd.s32 %s176, %s180
          %s182 = smul.addr %s181, 128
          %s183 = scalar_lea.hbm %s1, %s182
          %s184 = sshll.u32 %s175, 4
          %s185 = int_to_ptr.vmem [resolvable:$true] %s184
          %190 = dma.hbm_to_vmem [thread:$0]  %s183, 256, %s185, %s172, 128, 128, 8
        $region24: #{forward.1} parent=15 // pred_fallthru
          _
      $region16: #{forward.1} parent=5 // pred_fallthru
        _
      %p191 = scmp.le.s32.totalorder 1, %s17
      %p192 = scmp.lt.s32.totalorder %s17, 9
      %p193 = pnand %p191, %p192
      %p194 = pneg %p193
      // Predicated region
      $region25: #{forward.1} parent=5 // pred_check
        _
      $region26: #{forward.1} parent=5 // pred_check_branch
        %196 = sbr.rel (%p193) target = $region28
      $region27: #{forward.1} parent=5 // pred_region
        %s197 = ssub.s32 %s17, 1
        %s198 = sand.u32 %s53, 1
        %s199 = scalar_lea.sflag [#allocation3], %s198
        %s200 = sand.u32 %s53, 1
        %s201 = smul.addr %s200, 16
        %s202 = scalar_lea.vmem [#allocation2], %s201
        // Predicated region
        $region29: #{forward.1} parent=27 // pred_check
          %p203 = pneg %p66
        $region30: #{forward.1} parent=27 // pred_check_branch
          %205 = sbr.rel (%p203) target = $region32
        $region31: #{forward.1} parent=27 // pred_region
          %206 = dma.done %s199, 256
        $region32: #{forward.1} parent=27 // pred_fallthru
          _
        %s207 = sand.u32 %s81, 1
        %s208 = scalar_lea.sflag [#allocation6], %s207
        %s209 = sand.u32 %s81, 1
        %s210 = smul.addr %s209, 16
        %s211 = scalar_lea.vmem [#allocation5], %s210
        // Predicated region
        $region33: #{forward.1} parent=27 // pred_check
          %p212 = pneg %p94
        $region34: #{forward.1} parent=27 // pred_check_branch
          %214 = sbr.rel (%p212) target = $region36
        $region35: #{forward.1} parent=27 // pred_region
          %215 = dma.done %s208, 256
        $region36: #{forward.1} parent=27 // pred_fallthru
          _
        %s216 = sand.u32 %s53, 1
        %s217 = scalar_lea.sflag [#allocation3], %s216
        %s218 = sand.u32 %s53, 1
        %s219 = smul.addr %s218, 16
        %s220 = scalar_lea.vmem [#allocation2], %s219
        %p221 = pneg %p66
        %p222 = pneg %p63
        %s223 = sand.u32 %s81, 1
        %s224 = scalar_lea.sflag [#allocation6], %s223
        %s225 = sand.u32 %s81, 1
        %s226 = smul.addr %s225, 16
        %s227 = scalar_lea.vmem [#allocation5], %s226
        %p228 = pneg %p94
        %p229 = pneg %p91
        %p230 = pneg %p124
        %p231 = pneg %p121
        %s232 = sand.u32 %s111, 1
        %s233 = scalar_lea.sflag [#allocation4], %s232
        %s234 = sand.u32 %s111, 1
        %s235 = smul.addr %s234, 16
        %s236 = scalar_lea.vmem [#allocation7], %s235
        %s237 = smul.u32 2, %s29
        %s238 = smul.u32 2, %s29
        %s239 = smul.u32 2, %s29
        %v240 = vld [vmem:[%s202] sm:$0xff]
        %v241 = vld [vmem:[%s202 + $0x8] sm:$0xff]
        %v242 = vld [vmem:[%s211] sm:$0xff]
        %v243 = vld [vmem:[%s211 + $0x8] sm:$0xff]
        %v244 = vadd.s32 %v240, %v242
        %v245 = vadd.s32 %v241, %v243
        %v246 = vand.u32 %v244, 65535
        %v247 = vshra.s32 %v244, 16
        %v248 = vcvt.s32.f32 %v246
        %v249 = vcvt.s32.f32 %v247
        %250 = vmax.xlane.f32.xlu0 %v249
        %v251 = vpop.xlane.xlu0 %250
        %vm252 = vcmp.eq.f32.partialorder %v249, %v251
        %v253 = vsel %vm252, %v248, -inf
        %254 = vmax.xlane.f32.xlu0 %v253
        %v255 = vpop.xlane.xlu0 %254
        %v256 = vcvt.f32.s32 %v255
        %v257 = vcvt.f32.s32 %v251
        %v258 = vshll.u32 %v257, 16
        %v259 = vadd.s32 %v258, %v256
        %v260 = vand.u32 %v245, 65535
        %v261 = vshra.s32 %v245, 16
        %v262 = vcvt.s32.f32 %v260
        %v263 = vcvt.s32.f32 %v261
        %264 = vmax.xlane.f32.xlu0 %v263
        %v265 = vpop.xlane.xlu0 %264
        %vm266 = vcmp.eq.f32.partialorder %v263, %v265
        %v267 = vsel %vm266, %v262, -inf
        %268 = vmax.xlane.f32.xlu0 %v267
        %v269 = vpop.xlane.xlu0 %268
        %v270 = vcvt.f32.s32 %v269
        %v271 = vcvt.f32.s32 %v265
        %v272 = vshll.u32 %v271, 16
        %v273 = vadd.s32 %v272, %v270
        %v274 = vsub.s32 %v259, %v244
        %v275 = vsub.s32 %v273, %v245
        %v276 = vshra.s32 %v274, 4
        %v277 = vshra.s32 %v275, 4
        %vm278 = vcmp.lt.s32.totalorder %v276, 63
        %v279 = vsel %vm278, %v276, 63
        %vm280 = vcmp.lt.s32.totalorder %v277, 63
        %v281 = vsel %vm280, %v277, 63
        %v282 = vand.u32 %v279, 1
        %v283 = vand.u32 %v281, 1
        %vm284 = vcmp.ne.s32.totalorder %v282, 0
        %vm285 = vcmp.ne.s32.totalorder %v283, 0
        %v286 = vsel %vm284, 214.51952, 256.0
        %v287 = vsel %vm285, 214.51952, 256.0
        %v288 = vand.u32 %v279, 2
        %v289 = vand.u32 %v281, 2
        %vm290 = vcmp.ne.s32.totalorder %v288, 0
        %vm291 = vcmp.ne.s32.totalorder %v289, 0
        %v292 = vsel %vm290, 0.7021885, 1.0
        %v293 = vsel %vm291, 0.7021885, 1.0
        %v294 = vmul.f32 %v286, %v292
        %v295 = vmul.f32 %v287, %v293
        %v296 = vand.u32 %v279, 4
        %v297 = vand.u32 %v281, 4
        %vm298 = vcmp.ne.s32.totalorder %v296, 0
        %vm299 = vcmp.ne.s32.totalorder %v297, 0
        %v300 = vsel %vm298, 0.4930687, 1.0
        %v301 = vsel %vm299, 0.4930687, 1.0
        %v302 = vmul.f32 %v294, %v300
        %v303 = vmul.f32 %v295, %v301
        %v304 = vand.u32 %v279, 8
        %v305 = vand.u32 %v281, 8
        %vm306 = vcmp.ne.s32.totalorder %v304, 0
        %vm307 = vcmp.ne.s32.totalorder %v305, 0
        %v308 = vsel %vm306, 0.24311674, 1.0
        %v309 = vsel %vm307, 0.24311674, 1.0
        %v310 = vmul.f32 %v302, %v308
        %v311 = vmul.f32 %v303, %v309
        %v312 = vand.u32 %v279, 16
        %v313 = vand.u32 %v281, 16
        %vm314 = vcmp.ne.s32.totalorder %v312, 0
        %vm315 = vcmp.ne.s32.totalorder %v313, 0
        %v316 = vsel %vm314, 0.059105746, 1.0
        %v317 = vsel %vm315, 0.059105746, 1.0
        %v318 = vmul.f32 %v310, %v316
        %v319 = vmul.f32 %v311, %v317
        %v320 = vand.u32 %v279, 32
        %v321 = vand.u32 %v281, 32
        %vm322 = vcmp.ne.s32.totalorder %v320, 0
        %vm323 = vcmp.ne.s32.totalorder %v321, 0
        %v324 = vsel %vm322, 0.0034934892, 1.0
        %v325 = vsel %vm323, 0.0034934892, 1.0
        %v326 = vmul.f32 %v318, %v324
        %v327 = vmul.f32 %v319, %v325
        %v328 = vmin.f32 %v326, 255.0
        %v329 = vmin.f32 %v327, 255.0
        %v330 = vadd.f32 %v328, 0.5
        %v331 = vadd.f32 %v329, 0.5
        %v332 = vcvt.f32.s32.to.zero.pseudo %v330
        %v333 = vcvt.f32.s32.to.zero.pseudo %v331
        %v334 = vand.u32 %v332, 65535
        %v335 = vshrl.u32 %v332, 16
        %v336 = vcvt.s32.f32 %v334
        %v337 = vcvt.s32.f32 %v335
        %338 = vadd.xlane.f32.xlu0 %v336
        %v339 = vpop.xlane.xlu0 %338
        %340 = vadd.xlane.f32.xlu0 %v337
        %v341 = vpop.xlane.xlu0 %340
        %v342 = vcvt.f32.s32 %v339
        %v343 = vcvt.f32.s32 %v341
        %v344 = vshll.u32 %v343, 16
        %v345 = vadd.s32 %v344, %v342
        %v346 = vand.u32 %v333, 65535
        %v347 = vshrl.u32 %v333, 16
        %v348 = vcvt.s32.f32 %v346
        %v349 = vcvt.s32.f32 %v347
        %350 = vadd.xlane.f32.xlu0 %v348
        %v351 = vpop.xlane.xlu0 %350
        %352 = vadd.xlane.f32.xlu0 %v349
        %v353 = vpop.xlane.xlu0 %352
        %v354 = vcvt.f32.s32 %v351
        %v355 = vcvt.f32.s32 %v353
        %v356 = vshll.u32 %v355, 16
        %v357 = vadd.s32 %v356, %v354
        %vm358 = vcmp.ge.s32.totalorder %v345, 2048
        %vm359 = vcmp.ge.s32.totalorder %v357, 2048
        %v360 = vsel %vm358, 1, 0
        %v361 = vsel %vm359, 1, 0
        %vm362 = vcmp.ge.s32.totalorder %v345, 16384
        %vm363 = vcmp.ge.s32.totalorder %v357, 16384
        %v364 = vsel %vm362, 1, 0
        %v365 = vsel %vm363, 1, 0
        %v366 = vadd.s32 %v360, %v364
        %v367 = vadd.s32 %v361, %v365
        %vm368 = vcmp.ge.s32.totalorder %v345, 131072
        %vm369 = vcmp.ge.s32.totalorder %v357, 131072
        %v370 = vsel %vm368, 1, 0
        %v371 = vsel %vm369, 1, 0
        %v372 = vadd.s32 %v366, %v370
        %v373 = vadd.s32 %v367, %v371
        %v374 = vmul.u32 %v372, 3
        %v375 = vmul.u32 %v373, 3
        %v376 = vadd.s32 %v374, 3
        %v377 = vadd.s32 %v375, 3
        %v378 = vmul.u32 %v372, 4294967293
        %v379 = vmul.u32 %v373, 4294967293
        %v380 = vadd.s32 %v378, 9
        %v381 = vadd.s32 %v379, 9
        %v382 = vshra.s32 %v345, %v376
        %v383 = vshra.s32 %v357, %v377
        %vm384 = vcmp.gt.s32.totalorder %v382, 32
        %v385 = vsel %vm384, %v382, 32
        %vm386 = vcmp.gt.s32.totalorder %v383, 32
        %v387 = vsel %vm386, %v383, 32
        %vm388 = vcmp.lt.s32.totalorder %v385, 287
        %v389 = vsel %vm388, %v385, 287
        %vm390 = vcmp.lt.s32.totalorder %v387, 287
        %v391 = vsel %vm390, %v387, 287
        %v392 = vcvt.s32.f32 %v389
        %v393 = vcvt.s32.f32 %v391
        %v394 = vrcp.pop %v392
        %v395 = vrcp.pop %v393
        %v396 = vmul.f32 %v392, %v394
        %v397 = vmul.f32 %v393, %v395
        %v398 = vsub.f32 2.0, %v396
        %v399 = vsub.f32 2.0, %v397
        %v400 = vmul.f32 %v394, %v398
        %v401 = vmul.f32 %v395, %v399
        %v402 = vmul.f32 %v400, 8192.0
        %v403 = vmul.f32 %v401, 8192.0
        %v404 = vadd.f32 %v402, 0.5
        %v405 = vadd.f32 %v403, 0.5
        %v406 = vcvt.f32.s32.to.zero.pseudo %v404
        %v407 = vcvt.f32.s32.to.zero.pseudo %v405
        %v408 = vmul.u32 %v406, %v389
        %v409 = vmul.u32 %v407, %v391
        %v410 = vsub.s32 8192, %v408
        %v411 = vsub.s32 8192, %v409
        %v412 = vmul.u32 %v410, 2
        %v413 = vmul.u32 %v411, 2
        %vm414 = vcmp.ge.s32.totalorder %v412, %v389
        %vm415 = vcmp.ge.s32.totalorder %v413, %v391
        %v416 = vsel %vm414, 1, 0
        %v417 = vsel %vm415, 1, 0
        %v418 = vadd.s32 %v406, %v416
        %v419 = vadd.s32 %v407, %v417
        %v420 = vsub.s32 0, %v389
        %v421 = vsub.s32 0, %v391
        %vm422 = vcmp.lt.s32.totalorder %v412, %v420
        %vm423 = vcmp.lt.s32.totalorder %v413, %v421
        %v424 = vsel %vm422, 1, 0
        %v425 = vsel %vm423, 1, 0
        %v426 = vsub.s32 %v418, %v424
        %v427 = vsub.s32 %v419, %v425
        %vm428 = vcmp.gt.s32.totalorder %v426, 0
        %v429 = vsel %vm428, %v426, 0
        %vm430 = vcmp.gt.s32.totalorder %v427, 0
        %v431 = vsel %vm430, %v427, 0
        %vm432 = vcmp.lt.s32.totalorder %v429, 255
        %v433 = vsel %vm432, %v429, 255
        %vm434 = vcmp.lt.s32.totalorder %v431, 255
        %v435 = vsel %vm434, %v431, 255
        %v436 = vshll.u32 %v433, %v380
        %v437 = vshll.u32 %v435, %v381
        %v438 = vmul.u32 %v332, %v436
        %v439 = vmul.u32 %v333, %v437
        %v440 = vshra.s32 %v438, 12
        %v441 = vshra.s32 %v439, 12
        %442 = vst [vmem:[%s236] sm:$0xff] %v440
        %443 = vst [vmem:[%s236 + $0x8] sm:$0xff] %v441
        %s444 = sand.u32 %s111, 1
        %s445 = scalar_lea.sflag [#allocation4], %s444
        %s446 = sand.u32 %s111, 1
        %s447 = smul.addr %s446, 16
        %s448 = scalar_lea.vmem [#allocation7], %s447
        // Predicated region
        $region37: #{forward.1} parent=27 // pred_check
          %p449 = pneg %p121
        $region38: #{forward.1} parent=27 // pred_check_branch
          %451 = sbr.rel (%p449) target = $region40
        $region39: #{forward.1} parent=27 // pred_region
          %s452 = smul.u32 2, %s29
          %s454 = ssub.s32 256, 256
          %455 = vsyncadd %s445, %s454
          %s456 = smul.addr %s28, 2
          %s457 = sadd.s32 %s452, %s456
          %s458 = smul.addr %s27, 8
          %s459 = sadd.s32 %s457, %s458
          %s460 = smul.addr %s459, 128
          %s461 = scalar_lea.hbm %s2, %s460
          %s462 = sshll.u32 %s448, 4
          %s463 = int_to_ptr.vmem [resolvable:$true] %s462
          %468 = dma.vmem_to_hbm [thread:$0]  %s463, 256, %s461, %s445, 128, 128, 8
        $region40: #{forward.1} parent=27 // pred_fallthru
          _
      $region28: #{forward.1} parent=5 // pred_fallthru
        _
      %p469 = scmp.le.s32.totalorder 2, %s17
      // Predicated region
      $region41: #{forward.1} parent=5 // pred_check
        %p470 = pneg %p469
      $region42: #{forward.1} parent=5 // pred_check_branch
        %472 = sbr.rel (%p470) target = $region44
      $region43: #{forward.1} parent=5 // pred_region
        %s473 = ssub.s32 %s17, 2
        // Predicated region
        $region45: #{forward.1} parent=43 // pred_check
          %p474 = pneg %p127
        $region46: #{forward.1} parent=43 // pred_check_branch
          %476 = sbr.rel (%p474) target = $region48
        $region47: #{forward.1} parent=43 // pred_region
          %s477 = sand.u32 %s112, 1
          %s478 = scalar_lea.sflag [#allocation4], %s477
          %s479 = sand.u32 %s112, 1
          %s480 = smul.addr %s479, 16
          %s481 = scalar_lea.vmem [#allocation7], %s480
          %482 = dma.done %s478, 256
        $region48: #{forward.1} parent=43 // pred_fallthru
          _
      $region44: #{forward.1} parent=5 // pred_fallthru
        _
    $region6: #{forward.1} parent=1 // loop_footer
      %s21 = sadd.s32 1, %s17
    $region7: #{forward.1} parent=1 // loop_footer_branch
      %16 = sbr.rel target = $region3
    $region8: #{forward.1} parent=1 // loop_exit
      _
    %483 = vsyncpa [#allocation3], 1
    %s484 = scalar_lea.sflag [#allocation3], 1
    %485 = vsyncpa %s484, 1
    %486 = vsyncpa [#allocation6], 1
    %s487 = scalar_lea.sflag [#allocation6], 1
    %488 = vsyncpa %s487, 1
    %489 = vsyncpa [#allocation4], 1
    %s490 = scalar_lea.sflag [#allocation4], 1
    %491 = vsyncpa %s490, 1

</llo_original>
